<compile_context>
chip_gen: v5e
topology: v5e:2x2
jax: 0.10.0
libtpu: 0.0.40
codegen_flags: <defaults>
</compile_context>

<pallas_src>
import jax
import jax.numpy as jnp
from jax.experimental import pallas as pl
from jax.experimental.pallas import tpu as pltpu

_LANES = 128
_SUBLANES = 8


def _copy_kernel(x_ref, o_ref):
    # Pure identity copy: flatten semantics already handled by free reshapes
    # in the wrapper; the kernel just streams lane-dense tiles HBM->VMEM->HBM.
    o_ref[...] = x_ref[...]


def _round_up(x, m):
    return ((x + m - 1) // m) * m


def flatten(feat: jax.Array) -> jax.Array:
    """Pallas equivalent of `feat.view(feat.size(0), -1)` (row-major flatten)."""
    B = feat.shape[0]
    F = 1
    for d in feat.shape[1:]:
        F *= d
    total = B * F

    # Row-major (C-contiguous) flatten == torch .view(B, -1). Metadata-only.
    flat2d = feat.reshape(B, F)

    if total % _LANES == 0:
        # Lane-dense staging view: last dim = 128 lanes, zero lane padding.
        rows = total // _LANES
        staged = flat2d.reshape(rows, _LANES)

        itemsize = jnp.dtype(feat.dtype).itemsize
        # ~1 MiB per block => (2 bufs in + 2 bufs out) ~ 4 MiB VMEM: safe on
        # v5e (16 MiB scoped), v6e (32 MiB) and v7x (32 MiB scoped / 64 MiB).
        max_rows = max(
            _SUBLANES,
            (((1 << 20) // (_LANES * itemsize)) // _SUBLANES) * _SUBLANES,
        )
        tile_rows = min(_round_up(rows, _SUBLANES), max_rows)

        out = pl.pallas_call(
            _copy_kernel,
            out_shape=jax.ShapeDtypeStruct((rows, _LANES), feat.dtype),
            grid_spec=pltpu.PrefetchScalarGridSpec(
                num_scalar_prefetch=0,
                grid=(pl.cdiv(rows, tile_rows),),
                in_specs=[pl.BlockSpec((tile_rows, _LANES), lambda r: (r, 0))],
                out_specs=pl.BlockSpec((tile_rows, _LANES), lambda r: (r, 0)),
            ),
            compiler_params=pltpu.CompilerParams(
                dimension_semantics=("parallel",),
            ),
        )(staged)
        # Free metadata reshape back to (B, F).
        return out.reshape(B, F)

    # Fallback for odd sizes (total not a multiple of 128): one full-array
    # block — last two block dims equal the full array dims, so the (8,128)
    # tiling rule is satisfied without padding games.
    return pl.pallas_call(
        _copy_kernel,
        out_shape=jax.ShapeDtypeStruct((B, F), feat.dtype),
        grid_spec=pltpu.PrefetchScalarGridSpec(
            num_scalar_prefetch=0,
            grid=(1,),
            in_specs=[pl.BlockSpec((B, F), lambda i: (0, 0))],
            out_specs=pl.BlockSpec((B, F), lambda i: (0, 0)),
        ),
        compiler_params=pltpu.CompilerParams(
            dimension_semantics=("arbitrary",),
        ),
    )(flat2d)


if __name__ == "__main__":
    key = jax.random.PRNGKey(0)
    B, C, H, W = 2, 4, 16, 16
    x = jax.random.normal(key, (B, C, H, W), dtype=jnp.float32)

    out = flatten(x)
    jax.block_until_ready(out)

    # Verify against plain-JAX reshape (same semantics as torch .view(B, -1)).
    ref = x.reshape(B, -1)
    assert out.shape == (B, C * H * W), out.shape
    assert out.dtype == x.dtype
    assert jnp.array_equal(out, ref), "mismatch vs reference flatten"

    print("KERNEL_OK")
</pallas_src>

<mosaic_0001>
module attributes {stable_mosaic.version = 11 : i64} {
  func.func @_copy_kernel(%arg0: i32, %arg1: memref<16x128xf32, #tpu.memory_space<vmem>>, %arg2: memref<16x128xf32, #tpu.memory_space<vmem>>) attributes {dimension_semantics = [#tpu.dimension_semantics<parallel>], iteration_bounds = array<i64: 1>, scalar_prefetch = 0 : i64, scratch_operands = 0 : i64, tpu.core_type = #tpu.core_type<tc>, window_params = [{transform_indices = @transform_0, window_bounds = array<i64: 16, 128>}, {transform_indices = @transform_1, window_bounds = array<i64: 16, 128>}]} {
    %c0 = arith.constant 0 : index
    %c0_0 = arith.constant 0 : index
    %0 = vector.load %arg1[%c0, %c0_0] : memref<16x128xf32, #tpu.memory_space<vmem>>, vector<16x128xf32>
    %c0_1 = arith.constant 0 : index
    %c0_2 = arith.constant 0 : index
    %1 = vector.load %arg2[%c0_1, %c0_2] : memref<16x128xf32, #tpu.memory_space<vmem>>, vector<16x128xf32>
    tpu.vector_store %arg2[%c0_1, %c0_2], %0 {strides = array<i32>} : memref<16x128xf32, #tpu.memory_space<vmem>>, vector<16x128xf32>,
    return
  }
  func.func @transform_0(%arg0: i32) -> (i32, i32) {
    %c0_i32 = arith.constant 0 : i32
    %c0_i32_0 = arith.constant 0 : i32
    return %arg0, %c0_i32 : i32, i32
  }
  func.func @transform_1(%arg0: i32) -> (i32, i32) {
    %c0_i32 = arith.constant 0 : i32
    %c0_i32_0 = arith.constant 0 : i32
    return %arg0, %c0_i32 : i32, i32
  }
}

</mosaic_0001>

<llo_original>
// kernel: tpu_custom_call.1
$region0: #{tpu_custom_call.1}
  #allocation0 [shape = 'u32[]', space=smem, size = 0x4, offset = 0x4, fixed_abs, tag = 'smem constant byte address 0x4 - core index']
  #allocation1 [shape = 'u32[72,128]{1,0:T(1,128)}', space=vmem, size = 0x9000, scoped, tag = 'internal scratch']
  %s0 = inlined_call_operand.hbm [shape: f32[16,128], index: 0, kind: input, shape index: {}]
  %s1 = inlined_call_operand.hbm [shape: f32[16,128], index: 1, kind: output, shape index: {}]
  %s2 = sld [smem:[#allocation0]]
  $region18: #{tpu_custom_call.1} parent=0
    _
  %s4 = ssub.s32 1, %s2
  %s5 = scalar_select 0, %s4, %s2
  $region1: #{tpu_custom_call.1} parent=0
    #allocation2 [shape = 'u8[8192]{0}', space=vmem, size = 0x2000, scoped, tag = 'input window, operand 0, single buffered']
    #allocation3 [shape = 's32[1]{0}', space=sflag, size = 0x4, scoped, tag = 'scoped memory for tpu_custom_call.1']
    #allocation4 [shape = 's32[1]{0}', space=sflag, size = 0x4, scoped, tag = 'scoped memory for tpu_custom_call.1']
    #allocation5 [shape = 'u8[8192]{0}', space=vmem, size = 0x2000, scoped, tag = 'output window, operand 0, single buffered']
    %6 = vsyncpa [#allocation3], 0
    %7 = vsyncpa [#allocation4], 0
    // Predicated region
    $region2: #{tpu_custom_call.1} parent=1 // pred_check
      _
    $region3: #{tpu_custom_call.1} parent=1 // pred_check_branch
      %9 = sbr.rel (0) target = $region5
    $region4: #{tpu_custom_call.1} parent=1 // pred_region
      %11 = vsyncadd [#allocation3], 0
      %s12 = sshll.u32 %s0, 4
      %s13 = int_to_ptr.hbm [resolvable:$true] %s12
      %s14 = sshll.u32 [#allocation2], 4
      %s15 = int_to_ptr.vmem [resolvable:$true] %s14
      %20 = dma.hbm_to_vmem [thread:$0]  %s13, 256, %s15, [#allocation3], 128, 128, 8
    $region5: #{tpu_custom_call.1} parent=1 // pred_fallthru
      _
    // Predicated region
    $region6: #{tpu_custom_call.1} parent=1 // pred_check
      _
    $region7: #{tpu_custom_call.1} parent=1 // pred_check_branch
      %22 = sbr.rel (0) target = $region9
    $region8: #{tpu_custom_call.1} parent=1 // pred_region
      %24 = dma.done [#allocation3], 256
    $region9: #{tpu_custom_call.1} parent=1 // pred_fallthru
      _
    %v25 = vld [vmem:[#allocation2] sm:$0xff]
    %v26 = vld [vmem:[#allocation2 + $0x8] sm:$0xff]
    %27 = vst [vmem:[#allocation5] sm:$0xff] %v25
    %28 = vst [vmem:[#allocation5 + $0x8] sm:$0xff] %v26
    // Predicated region
    $region10: #{tpu_custom_call.1} parent=1 // pred_check
      _
    $region11: #{tpu_custom_call.1} parent=1 // pred_check_branch
      %30 = sbr.rel (0) target = $region13
    $region12: #{tpu_custom_call.1} parent=1 // pred_region
      %32 = vsyncadd [#allocation4], 0
      %s33 = sshll.u32 [#allocation5], 4
      %s34 = int_to_ptr.vmem [resolvable:$true] %s33
      %s35 = sshll.u32 %s1, 4
      %s36 = int_to_ptr.hbm [resolvable:$true] %s35
      %41 = dma.vmem_to_hbm [thread:$0]  %s34, 256, %s36, [#allocation4], 128, 128, 8
    $region13: #{tpu_custom_call.1} parent=1 // pred_fallthru
      _
    // Predicated region
    $region14: #{tpu_custom_call.1} parent=1 // pred_check
      _
    $region15: #{tpu_custom_call.1} parent=1 // pred_check_branch
      %43 = sbr.rel (0) target = $region17
    $region16: #{tpu_custom_call.1} parent=1 // pred_region
      %45 = dma.done [#allocation4], 256
    $region17: #{tpu_custom_call.1} parent=1 // pred_fallthru
      _
    %46 = vsyncpa [#allocation3], 1
    %47 = vsyncpa [#allocation4], 1

</llo_original>
